<compile_context>
chip_gen: v7x
topology: tpu7x:2x2x1
jax: 0.10.0
libtpu: 0.0.40
codegen_flags: <defaults>
</compile_context>

<pallas_src>
import jax
import jax.numpy as jnp
from jax.experimental import pallas as pl
from jax.experimental.pallas import tpu as pltpu

SENSORS = ("tof", "stereo")
N_FEATURES = 4
C_PER_SENSOR = 2 + N_FEATURES                        # raw channels: [sdf, weight, f0..f3]
C_DECODER_IN = len(SENSORS) * (1 + N_FEATURES + 1)   # 12
TEST_MODE = True


def _filtering_kernel(w_ref, x1_ref, x2_ref, out_ref):
    # w_ref : SMEM (13,) f32 scalars in Conv3d input-channel order:
    #         [w_sdf1, w_f1_0..3, w_tanhw1, w_sdf2, w_f2_0..3, w_tanhw2, bias]
    # x*_ref: VMEM (C_PER_SENSOR, TN) raw sensor channels [sdf, weight, f0..f3]
    # out_ref: VMEM (2, TN); row 0 = alpha (sensor_weighting), row 1 = fused tsdf
    x1 = x1_ref[...]
    x2 = x2_ref[...]
    sdf1, wgt1 = x1[0:1, :], x1[1:2, :]
    sdf2, wgt2 = x2[0:1, :], x2[1:2, :]

    # 1x1x1 Conv3d over 12 channels == 12 scalar-broadcast FMAs on the VPU.
    # The decoder input uses tanh(weight) instead of the raw weight channel,
    # so tanh (EUP) is only issued for the two weight rows.
    logit = w_ref[12] + w_ref[0] * sdf1 + w_ref[6] * sdf2
    logit = logit + w_ref[5] * jnp.tanh(wgt1) + w_ref[11] * jnp.tanh(wgt2)
    for f in range(N_FEATURES):
        logit = logit + w_ref[1 + f] * x1[2 + f:3 + f, :]
        logit = logit + w_ref[7 + f] * x2[2 + f:3 + f, :]
    alpha = jax.nn.sigmoid(logit)                     # (1, TN) -- 'sensor_weighting'

    # alpha_val[sensor k=0] = 0, alpha_val[sensor k>0] = 1 (reference ordering tof, stereo).
    a = jnp.where(wgt1 == 0.0, 0.0, alpha)
    a = jnp.where(wgt2 == 0.0, 1.0, a)

    out_ref[0:1, :] = alpha
    out_ref[1:2, :] = sdf2 + a * (sdf1 - sdf2)        # == a*sdf1 + (1-a)*sdf2


def filtering_net_forward(neighborhood, decoder_w, decoder_b, *, tile_n=8192):
    assert tile_n % 128 == 0
    s0, s1 = SENSORS
    t0 = neighborhood[s0].astype(jnp.float32)
    t1 = neighborhood[s1].astype(jnp.float32)
    B, C, D, H, W = t0.shape
    assert B == 1 and C == C_PER_SENSOR
    N = D * H * W

    # B == 1: NCDHW -> (C, N) is a pure reshape (no data movement required).
    x1 = t0.reshape(C, N)
    x2 = t1.reshape(C, N)

    # Pad the voxel (lane) axis to a lane-aligned tile multiple so every block and
    # every store is full width; padded voxels are zeros (finite, discarded below).
    tile = min(tile_n, pl.cdiv(N, 128) * 128)
    n_pad = pl.cdiv(N, tile) * tile
    if n_pad != N:
        x1 = jnp.pad(x1, ((0, 0), (0, n_pad - N)))
        x2 = jnp.pad(x2, ((0, 0), (0, n_pad - N)))

    # Decoder params as 13 SMEM scalars: Conv3d(12,1,1) weight (per-sensor channel
    # order [sdf, f0..f3, tanh(weight)]) followed by the bias.
    w_all = jnp.concatenate(
        [decoder_w.reshape(-1), decoder_b.reshape(-1)]).astype(jnp.float32)

    packed = pl.pallas_call(
        _filtering_kernel,
        out_shape=jax.ShapeDtypeStruct((2, n_pad), jnp.float32),
        grid=(n_pad // tile,),
        in_specs=[
            pl.BlockSpec(memory_space=pltpu.MemorySpace.SMEM),            # 13 scalars
            pl.BlockSpec((C_PER_SENSOR, tile), lambda i: (0, i)),          # sensor 0
            pl.BlockSpec((C_PER_SENSOR, tile), lambda i: (0, i)),          # sensor 1
        ],
        out_specs=pl.BlockSpec((2, tile), lambda i: (0, i)),
        compiler_params=pltpu.CompilerParams(dimension_semantics=("parallel",)),
        cost_estimate=pl.CostEstimate(
            flops=32 * n_pad,
            transcendentals=3 * n_pad,
            bytes_accessed=(2 * C_PER_SENSOR + 2) * 4 * n_pad),
    )(w_all, x1, x2)

    alpha = packed[0, :N].reshape(D, H, W)
    tsdf = packed[1, :N].reshape(D, H, W)

    output = {}
    for s in SENSORS:
        output["tsdf_" + s] = neighborhood[s][:, 0].reshape(D, H, W)
        output[s + "_init"] = neighborhood[s][:, 1].reshape(D, H, W) > 0
    if TEST_MODE:
        output["sensor_weighting"] = alpha
    output["tsdf"] = tsdf
    return output


def _reference_forward(neighborhood, decoder_w, decoder_b):
    """Pure-JAX mirror of the PyTorch forward (B = 1) used for validation."""
    sdf = {s: neighborhood[s][:, 0] for s in SENSORS}
    weight = {s: neighborhood[s][:, 1][:, None] for s in SENSORS}
    parts = []
    for s in SENSORS:
        parts.append(neighborhood[s][:, 0:1])                     # sdf_to_weight_head
        parts.append(neighborhood[s][:, 2:])                      # feature_to_weight_head
        parts.append(jnp.tanh(neighborhood[s][:, 1])[:, None])    # weight_to_weight_head
    inp = jnp.concatenate(parts, axis=1)                          # (1, 12, D, H, W)
    logit = jnp.einsum("bcdhw,c->bdhw", inp, decoder_w)[:, None] + decoder_b[0]
    alpha = jax.nn.sigmoid(logit)                                 # (1, 1, D, H, W)
    alpha_sdf = alpha
    alpha_val = {SENSORS[0]: jnp.zeros_like(sdf[SENSORS[0]]),
                 SENSORS[1]: jnp.ones_like(sdf[SENSORS[1]])}
    for s in SENSORS:
        alpha_sdf = jnp.where(weight[s] == 0, alpha_val[s], alpha_sdf)
    tsdf = alpha_sdf * sdf[SENSORS[0]] + (1.0 - alpha_sdf) * sdf[SENSORS[1]]
    return jnp.squeeze(alpha), jnp.squeeze(tsdf)


if __name__ == "__main__":
    key = jax.random.PRNGKey(0)
    B, D, H, W = 1, 8, 9, 10      # N = 720: not a multiple of 128 -> exercises padding
    kx0, kx1, kw0, kw1, kd = jax.random.split(key, 5)

    def make_sensor(kx, kw):
        t = jax.random.normal(kx, (B, C_PER_SENSOR, D, H, W), jnp.float32)
        k1, k2 = jax.random.split(kw)
        # Weight channel: non-negative with exact zeros so the where(weight==0, ...) path fires.
        wgt = jnp.where(jax.random.uniform(k1, (B, D, H, W)) > 0.3,
                        jnp.abs(jax.random.normal(k2, (B, D, H, W), jnp.float32)),
                        0.0)
        return t.at[:, 1].set(wgt)

    neighborhood = {
        "tof": make_sensor(kx0, kw0),
        "stereo": make_sensor(kx1, kw1),
        "test_mode": True,
    }

    # Deterministic decoder params (Conv3d(12, 1, 1) weight flattened + bias).
    decoder_w = 0.5 * jax.random.normal(kd, (C_DECODER_IN,), jnp.float32)
    decoder_b = 0.1 * jnp.ones((1,), jnp.float32)

    ref_alpha, ref_tsdf = _reference_forward(neighborhood, decoder_w, decoder_b)

    # Default (large) tile: single padded lane-dense block.
    out = filtering_net_forward(neighborhood, decoder_w, decoder_b)
    jax.block_until_ready(out["tsdf"])
    assert out["tsdf"].shape == (D, H, W)
    assert out["sensor_weighting"].shape == (D, H, W)
    assert jnp.allclose(out["sensor_weighting"], ref_alpha, atol=1e-5, rtol=1e-5)
    assert jnp.allclose(out["tsdf"], ref_tsdf, atol=1e-5, rtol=1e-5)

    # Small tile: exercises the multi-step grid + padding path.
    out_small = filtering_net_forward(neighborhood, decoder_w, decoder_b, tile_n=256)
    jax.block_until_ready(out_small["tsdf"])
    assert jnp.allclose(out_small["sensor_weighting"], ref_alpha, atol=1e-5, rtol=1e-5)
    assert jnp.allclose(out_small["tsdf"], ref_tsdf, atol=1e-5, rtol=1e-5)

    print("KERNEL_OK")
</pallas_src>

<mosaic_0001>
module attributes {stable_mosaic.version = 11 : i64} {
  func.func @_filtering_kernel(%arg0: i32, %arg1: memref<13xf32, #tpu.memory_space<smem>>, %arg2: memref<6x768xf32, #tpu.memory_space<vmem>>, %arg3: memref<6x768xf32, #tpu.memory_space<vmem>>, %arg4: memref<2x768xf32, #tpu.memory_space<vmem>>) attributes {dimension_semantics = [#tpu.dimension_semantics<parallel>], iteration_bounds = array<i64: 1>, scalar_prefetch = 0 : i64, scratch_operands = 0 : i64, tpu.core_type = #tpu.core_type<tc>, window_params = [{transform_indices = @transform_0, window_bounds = array<i64: 13>}, {transform_indices = @transform_1, window_bounds = array<i64: 6, 768>}, {transform_indices = @transform_2, window_bounds = array<i64: 6, 768>}, {transform_indices = @transform_3, window_bounds = array<i64: 2, 768>}]} {
    %c0 = arith.constant 0 : index
    %c0_0 = arith.constant 0 : index
    %0 = vector.load %arg2[%c0, %c0_0] : memref<6x768xf32, #tpu.memory_space<vmem>>, vector<6x768xf32>
    %c0_1 = arith.constant 0 : index
    %c0_2 = arith.constant 0 : index
    %1 = vector.load %arg3[%c0_1, %c0_2] : memref<6x768xf32, #tpu.memory_space<vmem>>, vector<6x768xf32>
    %2 = vector.extract_strided_slice %0 {offsets = [0, 0], sizes = [1, 768], strides = [1, 1]} : vector<6x768xf32> to vector<1x768xf32>
    %3 = vector.extract_strided_slice %0 {offsets = [1, 0], sizes = [1, 768], strides = [1, 1]} : vector<6x768xf32> to vector<1x768xf32>
    %4 = vector.extract_strided_slice %1 {offsets = [0, 0], sizes = [1, 768], strides = [1, 1]} : vector<6x768xf32> to vector<1x768xf32>
    %5 = vector.extract_strided_slice %1 {offsets = [1, 0], sizes = [1, 768], strides = [1, 1]} : vector<6x768xf32> to vector<1x768xf32>
    %c12 = arith.constant 12 : index
    %6 = memref.load %arg1[%c12] : memref<13xf32, #tpu.memory_space<smem>>
    %c0_3 = arith.constant 0 : index
    %7 = memref.load %arg1[%c0_3] : memref<13xf32, #tpu.memory_space<smem>>
    %8 = vector.broadcast %7 : f32 to vector<1x768xf32>
    %9 = arith.mulf %8, %2 : vector<1x768xf32>
    %10 = vector.broadcast %6 : f32 to vector<1x768xf32>
    %11 = arith.addf %10, %9 : vector<1x768xf32>
    %c6 = arith.constant 6 : index
    %12 = memref.load %arg1[%c6] : memref<13xf32, #tpu.memory_space<smem>>
    %13 = vector.broadcast %12 : f32 to vector<1x768xf32>
    %14 = arith.mulf %13, %4 : vector<1x768xf32>
    %15 = arith.addf %11, %14 : vector<1x768xf32>
    %c5 = arith.constant 5 : index
    %16 = memref.load %arg1[%c5] : memref<13xf32, #tpu.memory_space<smem>>
    %17 = math.tanh %3 : vector<1x768xf32>
    %18 = vector.broadcast %16 : f32 to vector<1x768xf32>
    %19 = arith.mulf %18, %17 : vector<1x768xf32>
    %20 = arith.addf %15, %19 : vector<1x768xf32>
    %c11 = arith.constant 11 : index
    %21 = memref.load %arg1[%c11] : memref<13xf32, #tpu.memory_space<smem>>
    %22 = math.tanh %5 : vector<1x768xf32>
    %23 = vector.broadcast %21 : f32 to vector<1x768xf32>
    %24 = arith.mulf %23, %22 : vector<1x768xf32>
    %25 = arith.addf %20, %24 : vector<1x768xf32>
    %c1 = arith.constant 1 : index
    %26 = memref.load %arg1[%c1] : memref<13xf32, #tpu.memory_space<smem>>
    %27 = vector.extract_strided_slice %0 {offsets = [2, 0], sizes = [1, 768], strides = [1, 1]} : vector<6x768xf32> to vector<1x768xf32>
    %28 = vector.broadcast %26 : f32 to vector<1x768xf32>
    %29 = arith.mulf %28, %27 : vector<1x768xf32>
    %30 = arith.addf %25, %29 : vector<1x768xf32>
    %c7 = arith.constant 7 : index
    %31 = memref.load %arg1[%c7] : memref<13xf32, #tpu.memory_space<smem>>
    %32 = vector.extract_strided_slice %1 {offsets = [2, 0], sizes = [1, 768], strides = [1, 1]} : vector<6x768xf32> to vector<1x768xf32>
    %33 = vector.broadcast %31 : f32 to vector<1x768xf32>
    %34 = arith.mulf %33, %32 : vector<1x768xf32>
    %35 = arith.addf %30, %34 : vector<1x768xf32>
    %c2 = arith.constant 2 : index
    %36 = memref.load %arg1[%c2] : memref<13xf32, #tpu.memory_space<smem>>
    %37 = vector.extract_strided_slice %0 {offsets = [3, 0], sizes = [1, 768], strides = [1, 1]} : vector<6x768xf32> to vector<1x768xf32>
    %38 = vector.broadcast %36 : f32 to vector<1x768xf32>
    %39 = arith.mulf %38, %37 : vector<1x768xf32>
    %40 = arith.addf %35, %39 : vector<1x768xf32>
    %c8 = arith.constant 8 : index
    %41 = memref.load %arg1[%c8] : memref<13xf32, #tpu.memory_space<smem>>
    %42 = vector.extract_strided_slice %1 {offsets = [3, 0], sizes = [1, 768], strides = [1, 1]} : vector<6x768xf32> to vector<1x768xf32>
    %43 = vector.broadcast %41 : f32 to vector<1x768xf32>
    %44 = arith.mulf %43, %42 : vector<1x768xf32>
    %45 = arith.addf %40, %44 : vector<1x768xf32>
    %c3 = arith.constant 3 : index
    %46 = memref.load %arg1[%c3] : memref<13xf32, #tpu.memory_space<smem>>
    %47 = vector.extract_strided_slice %0 {offsets = [4, 0], sizes = [1, 768], strides = [1, 1]} : vector<6x768xf32> to vector<1x768xf32>
    %48 = vector.broadcast %46 : f32 to vector<1x768xf32>
    %49 = arith.mulf %48, %47 : vector<1x768xf32>
    %50 = arith.addf %45, %49 : vector<1x768xf32>
    %c9 = arith.constant 9 : index
    %51 = memref.load %arg1[%c9] : memref<13xf32, #tpu.memory_space<smem>>
    %52 = vector.extract_strided_slice %1 {offsets = [4, 0], sizes = [1, 768], strides = [1, 1]} : vector<6x768xf32> to vector<1x768xf32>
    %53 = vector.broadcast %51 : f32 to vector<1x768xf32>
    %54 = arith.mulf %53, %52 : vector<1x768xf32>
    %55 = arith.addf %50, %54 : vector<1x768xf32>
    %c4 = arith.constant 4 : index
    %56 = memref.load %arg1[%c4] : memref<13xf32, #tpu.memory_space<smem>>
    %57 = vector.extract_strided_slice %0 {offsets = [5, 0], sizes = [1, 768], strides = [1, 1]} : vector<6x768xf32> to vector<1x768xf32>
    %58 = vector.broadcast %56 : f32 to vector<1x768xf32>
    %59 = arith.mulf %58, %57 : vector<1x768xf32>
    %60 = arith.addf %55, %59 : vector<1x768xf32>
    %c10 = arith.constant 10 : index
    %61 = memref.load %arg1[%c10] : memref<13xf32, #tpu.memory_space<smem>>
    %62 = vector.extract_strided_slice %1 {offsets = [5, 0], sizes = [1, 768], strides = [1, 1]} : vector<6x768xf32> to vector<1x768xf32>
    %63 = vector.broadcast %61 : f32 to vector<1x768xf32>
    %64 = arith.mulf %63, %62 : vector<1x768xf32>
    %65 = arith.addf %60, %64 : vector<1x768xf32>
    %66 = arith.negf %65 : vector<1x768xf32>
    %67 = math.exp %66 : vector<1x768xf32>
    %cst = arith.constant 1.000000e+00 : f32
    %68 = vector.broadcast %cst : f32 to vector<1x768xf32>
    %69 = arith.addf %68, %67 : vector<1x768xf32>
    %70 = arith.divf %68, %69 : vector<1x768xf32>
    %cst_4 = arith.constant 0.000000e+00 : f32
    %71 = vector.broadcast %cst_4 : f32 to vector<1x768xf32>
    %72 = arith.cmpf oeq, %3, %71 : vector<1x768xf32>
    %cst_5 = arith.constant 0.000000e+00 : f32
    %73 = vector.broadcast %cst_5 : f32 to vector<1x768xf32>
    %74 = arith.select %72, %73, %70 : vector<1x768xi1>, vector<1x768xf32>
    %cst_6 = arith.constant 0.000000e+00 : f32
    %75 = vector.broadcast %cst_6 : f32 to vector<1x768xf32>
    %76 = arith.cmpf oeq, %5, %75 : vector<1x768xf32>
    %cst_7 = arith.constant 1.000000e+00 : f32
    %77 = vector.broadcast %cst_7 : f32 to vector<1x768xf32>
    %78 = arith.select %76, %77, %74 : vector<1x768xi1>, vector<1x768xf32>
    %c0_8 = arith.constant 0 : index
    %c0_9 = arith.constant 0 : index
    %79 = vector.load %arg4[%c0_8, %c0_9] : memref<2x768xf32, #tpu.memory_space<vmem>>, vector<1x768xf32>
    tpu.vector_store %arg4[%c0_8, %c0_9], %70 {strides = array<i32>} : memref<2x768xf32, #tpu.memory_space<vmem>>, vector<1x768xf32>,
    %80 = arith.subf %2, %4 : vector<1x768xf32>
    %81 = arith.mulf %78, %80 : vector<1x768xf32>
    %82 = arith.addf %4, %81 : vector<1x768xf32>
    %c1_10 = arith.constant 1 : index
    %c0_11 = arith.constant 0 : index
    %83 = vector.load %arg4[%c1_10, %c0_11] : memref<2x768xf32, #tpu.memory_space<vmem>>, vector<1x768xf32>
    tpu.vector_store %arg4[%c1_10, %c0_11], %82 {strides = array<i32>} : memref<2x768xf32, #tpu.memory_space<vmem>>, vector<1x768xf32>,
    return
  }
  func.func @transform_0(%arg0: i32) -> i32 {
    %c0_i32 = arith.constant 0 : i32
    %c0_i32_0 = arith.constant 0 : i32
    return %c0_i32 : i32
  }
  func.func @transform_1(%arg0: i32) -> (i32, i32) {
    %c0_i32 = arith.constant 0 : i32
    %c0_i32_0 = arith.constant 0 : i32
    return %c0_i32, %arg0 : i32, i32
  }
  func.func @transform_2(%arg0: i32) -> (i32, i32) {
    %c0_i32 = arith.constant 0 : i32
    %c0_i32_0 = arith.constant 0 : i32
    return %c0_i32, %arg0 : i32, i32
  }
  func.func @transform_3(%arg0: i32) -> (i32, i32) {
    %c0_i32 = arith.constant 0 : i32
    %c0_i32_0 = arith.constant 0 : i32
    return %c0_i32, %arg0 : i32, i32
  }
}

</mosaic_0001>

<llo_original>
// kernel: tpu_custom_call.1
$region0: #{tpu_custom_call.1}
  #allocation0 [shape = 'u32[]', space=smem, size = 0x4, offset = 0x4, fixed_abs, tag = 'smem constant byte address 0x4 - core index']
  #allocation1 [shape = 'u32[144,128]{1,0:T(1,128)}', space=vmem, size = 0x12000, scoped, tag = 'internal scratch']
  %s0 = inlined_call_operand.hbm [shape: f32[13], index: 0, kind: input, shape index: {}]
  %s1 = inlined_call_operand.hbm [shape: f32[6,768], index: 1, kind: input, shape index: {}]
  %s2 = inlined_call_operand.hbm [shape: f32[6,768], index: 2, kind: input, shape index: {}]
  %s3 = inlined_call_operand.hbm [shape: f32[2,768], index: 3, kind: output, shape index: {}]
  %s4 = sld [smem:[#allocation0]]
  $region34: #{tpu_custom_call.1} parent=0
    _
  %s6 = ssub.s32 1, %s4
  %s7 = scalar_select 0, %s6, %s4
  $region1: #{tpu_custom_call.1} parent=0
    #allocation2 [shape = 'u8[512]{0}', space=smem, size = 0x200, scoped, tag = 'input window, operand 0, single buffered']
    #allocation3 [shape = 's32[1]{0}', space=sflag, size = 0x4, scoped, tag = 'scoped memory for tpu_custom_call.1']
    #allocation4 [shape = 's32[1]{0}', space=sflag, size = 0x4, scoped, tag = 'scoped memory for tpu_custom_call.1']
    #allocation5 [shape = 's32[1]{0}', space=sflag, size = 0x4, scoped, tag = 'scoped memory for tpu_custom_call.1']
    #allocation6 [shape = 'u8[24576]{0}', space=vmem, size = 0x6000, scoped, tag = 'input window, operand 1, single buffered']
    #allocation7 [shape = 'u8[24576]{0}', space=vmem, size = 0x6000, scoped, tag = 'input window, operand 2, single buffered']
    #allocation8 [shape = 's32[1]{0}', space=sflag, size = 0x4, scoped, tag = 'scoped memory for tpu_custom_call.1']
    #allocation9 [shape = 'u8[6144]{0}', space=vmem, size = 0x1800, scoped, tag = 'output window, operand 0, single buffered']
    %8 = vsyncpa [#allocation5], 0
    %9 = vsyncpa [#allocation3], 0
    %10 = vsyncpa [#allocation8], 0
    %11 = vsyncpa [#allocation4], 0
    // Predicated region
    $region2: #{tpu_custom_call.1} parent=1 // pred_check
      _
    $region3: #{tpu_custom_call.1} parent=1 // pred_check_branch
      %13 = sbr.rel (0) target = $region5
    $region4: #{tpu_custom_call.1} parent=1 // pred_region
      %s15 = ssub.s32 16, 16
      %16 = vsyncadd [#allocation5], %s15
      %19 = dma.hbm_to_smem %s0, 16, [#allocation2], [#allocation5]
    $region5: #{tpu_custom_call.1} parent=1 // pred_fallthru
      _
    // Predicated region
    $region6: #{tpu_custom_call.1} parent=1 // pred_check
      _
    $region7: #{tpu_custom_call.1} parent=1 // pred_check_branch
      %21 = sbr.rel (0) target = $region9
    $region8: #{tpu_custom_call.1} parent=1 // pred_region
      %s23 = ssub.s32 768, 768
      %24 = vsyncadd [#allocation3], %s23
      %s26 = sshll.u32 [#allocation6], 4
      %s27 = int_to_ptr.vmem [resolvable:$true] %s26
      %29 = dma.hbm_to_vmem [thread:$0]  %s1, 768, %s27, [#allocation3]
    $region9: #{tpu_custom_call.1} parent=1 // pred_fallthru
      _
    // Predicated region
    $region10: #{tpu_custom_call.1} parent=1 // pred_check
      _
    $region11: #{tpu_custom_call.1} parent=1 // pred_check_branch
      %31 = sbr.rel (0) target = $region13
    $region12: #{tpu_custom_call.1} parent=1 // pred_region
      %s33 = ssub.s32 768, 768
      %34 = vsyncadd [#allocation8], %s33
      %s36 = sshll.u32 [#allocation7], 4
      %s37 = int_to_ptr.vmem [resolvable:$true] %s36
      %39 = dma.hbm_to_vmem [thread:$0]  %s2, 768, %s37, [#allocation8]
    $region13: #{tpu_custom_call.1} parent=1 // pred_fallthru
      _
    // Predicated region
    $region14: #{tpu_custom_call.1} parent=1 // pred_check
      _
    $region15: #{tpu_custom_call.1} parent=1 // pred_check_branch
      %41 = sbr.rel (0) target = $region17
    $region16: #{tpu_custom_call.1} parent=1 // pred_region
      %42 = dma.done [#allocation5], 16
    $region17: #{tpu_custom_call.1} parent=1 // pred_fallthru
      _
    // Predicated region
    $region18: #{tpu_custom_call.1} parent=1 // pred_check
      _
    $region19: #{tpu_custom_call.1} parent=1 // pred_check_branch
      %44 = sbr.rel (0) target = $region21
    $region20: #{tpu_custom_call.1} parent=1 // pred_region
      %45 = dma.done [#allocation3], 768
    $region21: #{tpu_custom_call.1} parent=1 // pred_fallthru
      _
    // Predicated region
    $region22: #{tpu_custom_call.1} parent=1 // pred_check
      _
    $region23: #{tpu_custom_call.1} parent=1 // pred_check_branch
      %47 = sbr.rel (0) target = $region25
    $region24: #{tpu_custom_call.1} parent=1 // pred_region
      %48 = dma.done [#allocation8], 768
    $region25: #{tpu_custom_call.1} parent=1 // pred_fallthru
      _
    %49 = sfence
    %v50 = vld [vmem:[#allocation6] sm:$0x3f]
    %v51 = vld [vmem:[#allocation6 + $0x8] sm:$0x3f]
    %v52 = vld [vmem:[#allocation6 + $0x10] sm:$0x3f]
    %v53 = vld [vmem:[#allocation6 + $0x18] sm:$0x3f]
    %v54 = vld [vmem:[#allocation6 + $0x20] sm:$0x3f]
    %v55 = vld [vmem:[#allocation6 + $0x28] sm:$0x3f]
    %v56 = vld [vmem:[#allocation7] sm:$0x3f]
    %v57 = vld [vmem:[#allocation7 + $0x8] sm:$0x3f]
    %v58 = vld [vmem:[#allocation7 + $0x10] sm:$0x3f]
    %v59 = vld [vmem:[#allocation7 + $0x18] sm:$0x3f]
    %v60 = vld [vmem:[#allocation7 + $0x20] sm:$0x3f]
    %v61 = vld [vmem:[#allocation7 + $0x28] sm:$0x3f]
    %s62 = sld [smem:[#allocation2 + $0xc]]
    %s63 = sld [smem:[#allocation2]]
    %v64 = vstv %s63
    %v65 = vmul.f32 %v64, %v50
    %v66 = vmul.f32 %v64, %v51
    %v67 = vmul.f32 %v64, %v52
    %v68 = vmul.f32 %v64, %v53
    %v69 = vmul.f32 %v64, %v54
    %v70 = vmul.f32 %v64, %v55
    %v71 = vstv %s62
    %v72 = vadd.f32 %v71, %v65
    %v73 = vadd.f32 %v71, %v66
    %v74 = vadd.f32 %v71, %v67
    %v75 = vadd.f32 %v71, %v68
    %v76 = vadd.f32 %v71, %v69
    %v77 = vadd.f32 %v71, %v70
    %s78 = sld [smem:[#allocation2 + $0x6]]
    %v79 = vstv %s78
    %v80 = vmul.f32 %v79, %v56
    %v81 = vmul.f32 %v79, %v57
    %v82 = vmul.f32 %v79, %v58
    %v83 = vmul.f32 %v79, %v59
    %v84 = vmul.f32 %v79, %v60
    %v85 = vmul.f32 %v79, %v61
    %v86 = vadd.f32 %v72, %v80
    %v87 = vadd.f32 %v73, %v81
    %v88 = vadd.f32 %v74, %v82
    %v89 = vadd.f32 %v75, %v83
    %v90 = vadd.f32 %v76, %v84
    %v91 = vadd.f32 %v77, %v85
    %s92 = sld [smem:[#allocation2 + $0x5]]
    %v93 = vtanh.pop %v50
    %v94 = vtanh.pop %v51
    %v95 = vtanh.pop %v52
    %v96 = vtanh.pop %v53
    %v97 = vtanh.pop %v54
    %v98 = vtanh.pop %v55
    %v99 = vstv %s92
    %v100 = vmul.f32 %v99, %v93
    %v101 = vmul.f32 %v99, %v94
    %v102 = vmul.f32 %v99, %v95
    %v103 = vmul.f32 %v99, %v96
    %v104 = vmul.f32 %v99, %v97
    %v105 = vmul.f32 %v99, %v98
    %v112 = vrot.slane %v100, 1
    %v113 = vrot.slane %v101, 1
    %v114 = vrot.slane %v102, 1
    %v115 = vrot.slane %v103, 1
    %v116 = vrot.slane %v104, 1
    %v117 = vrot.slane %v105, 1
    %v124 = vadd.f32 %v86, %v112
    %v125 = vadd.f32 %v87, %v113
    %v126 = vadd.f32 %v88, %v114
    %v127 = vadd.f32 %v89, %v115
    %v128 = vadd.f32 %v90, %v116
    %v129 = vadd.f32 %v91, %v117
    %s130 = sld [smem:[#allocation2 + $0xb]]
    %v131 = vtanh.pop %v56
    %v132 = vtanh.pop %v57
    %v133 = vtanh.pop %v58
    %v134 = vtanh.pop %v59
    %v135 = vtanh.pop %v60
    %v136 = vtanh.pop %v61
    %v137 = vstv %s130
    %v138 = vmul.f32 %v137, %v131
    %v139 = vmul.f32 %v137, %v132
    %v140 = vmul.f32 %v137, %v133
    %v141 = vmul.f32 %v137, %v134
    %v142 = vmul.f32 %v137, %v135
    %v143 = vmul.f32 %v137, %v136
    %v150 = vrot.slane %v138, 1
    %v151 = vrot.slane %v139, 1
    %v152 = vrot.slane %v140, 1
    %v153 = vrot.slane %v141, 1
    %v154 = vrot.slane %v142, 1
    %v155 = vrot.slane %v143, 1
    %v162 = vadd.f32 %v124, %v150
    %v163 = vadd.f32 %v125, %v151
    %v164 = vadd.f32 %v126, %v152
    %v165 = vadd.f32 %v127, %v153
    %v166 = vadd.f32 %v128, %v154
    %v167 = vadd.f32 %v129, %v155
    %s168 = sld [smem:[#allocation2 + $0x1]]
    %v169 = vstv %s168
    %v170 = vmul.f32 %v169, %v50
    %v171 = vmul.f32 %v169, %v51
    %v172 = vmul.f32 %v169, %v52
    %v173 = vmul.f32 %v169, %v53
    %v174 = vmul.f32 %v169, %v54
    %v175 = vmul.f32 %v169, %v55
    %v182 = vrot.slane %v170, 2
    %v183 = vrot.slane %v171, 2
    %v184 = vrot.slane %v172, 2
    %v185 = vrot.slane %v173, 2
    %v186 = vrot.slane %v174, 2
    %v187 = vrot.slane %v175, 2
    %v194 = vadd.f32 %v162, %v182
    %v195 = vadd.f32 %v163, %v183
    %v196 = vadd.f32 %v164, %v184
    %v197 = vadd.f32 %v165, %v185
    %v198 = vadd.f32 %v166, %v186
    %v199 = vadd.f32 %v167, %v187
    %s200 = sld [smem:[#allocation2 + $0x7]]
    %v201 = vstv %s200
    %v202 = vmul.f32 %v201, %v56
    %v203 = vmul.f32 %v201, %v57
    %v204 = vmul.f32 %v201, %v58
    %v205 = vmul.f32 %v201, %v59
    %v206 = vmul.f32 %v201, %v60
    %v207 = vmul.f32 %v201, %v61
    %v214 = vrot.slane %v202, 2
    %v215 = vrot.slane %v203, 2
    %v216 = vrot.slane %v204, 2
    %v217 = vrot.slane %v205, 2
    %v218 = vrot.slane %v206, 2
    %v219 = vrot.slane %v207, 2
    %v226 = vadd.f32 %v194, %v214
    %v227 = vadd.f32 %v195, %v215
    %v228 = vadd.f32 %v196, %v216
    %v229 = vadd.f32 %v197, %v217
    %v230 = vadd.f32 %v198, %v218
    %v231 = vadd.f32 %v199, %v219
    %s232 = sld [smem:[#allocation2 + $0x2]]
    %v233 = vstv %s232
    %v234 = vmul.f32 %v233, %v50
    %v235 = vmul.f32 %v233, %v51
    %v236 = vmul.f32 %v233, %v52
    %v237 = vmul.f32 %v233, %v53
    %v238 = vmul.f32 %v233, %v54
    %v239 = vmul.f32 %v233, %v55
    %v246 = vrot.slane %v234, 3
    %v247 = vrot.slane %v235, 3
    %v248 = vrot.slane %v236, 3
    %v249 = vrot.slane %v237, 3
    %v250 = vrot.slane %v238, 3
    %v251 = vrot.slane %v239, 3
    %v258 = vadd.f32 %v226, %v246
    %v259 = vadd.f32 %v227, %v247
    %v260 = vadd.f32 %v228, %v248
    %v261 = vadd.f32 %v229, %v249
    %v262 = vadd.f32 %v230, %v250
    %v263 = vadd.f32 %v231, %v251
    %s264 = sld [smem:[#allocation2 + $0x8]]
    %v265 = vstv %s264
    %v266 = vmul.f32 %v265, %v56
    %v267 = vmul.f32 %v265, %v57
    %v268 = vmul.f32 %v265, %v58
    %v269 = vmul.f32 %v265, %v59
    %v270 = vmul.f32 %v265, %v60
    %v271 = vmul.f32 %v265, %v61
    %v278 = vrot.slane %v266, 3
    %v279 = vrot.slane %v267, 3
    %v280 = vrot.slane %v268, 3
    %v281 = vrot.slane %v269, 3
    %v282 = vrot.slane %v270, 3
    %v283 = vrot.slane %v271, 3
    %v290 = vadd.f32 %v258, %v278
    %v291 = vadd.f32 %v259, %v279
    %v292 = vadd.f32 %v260, %v280
    %v293 = vadd.f32 %v261, %v281
    %v294 = vadd.f32 %v262, %v282
    %v295 = vadd.f32 %v263, %v283
    %s296 = sld [smem:[#allocation2 + $0x3]]
    %v297 = vstv %s296
    %v298 = vmul.f32 %v297, %v50
    %v299 = vmul.f32 %v297, %v51
    %v300 = vmul.f32 %v297, %v52
    %v301 = vmul.f32 %v297, %v53
    %v302 = vmul.f32 %v297, %v54
    %v303 = vmul.f32 %v297, %v55
    %v310 = vrot.slane %v298, 4
    %v311 = vrot.slane %v299, 4
    %v312 = vrot.slane %v300, 4
    %v313 = vrot.slane %v301, 4
    %v314 = vrot.slane %v302, 4
    %v315 = vrot.slane %v303, 4
    %v322 = vadd.f32 %v290, %v310
    %v323 = vadd.f32 %v291, %v311
    %v324 = vadd.f32 %v292, %v312
    %v325 = vadd.f32 %v293, %v313
    %v326 = vadd.f32 %v294, %v314
    %v327 = vadd.f32 %v295, %v315
    %s328 = sld [smem:[#allocation2 + $0x9]]
    %v329 = vstv %s328
    %v330 = vmul.f32 %v329, %v56
    %v331 = vmul.f32 %v329, %v57
    %v332 = vmul.f32 %v329, %v58
    %v333 = vmul.f32 %v329, %v59
    %v334 = vmul.f32 %v329, %v60
    %v335 = vmul.f32 %v329, %v61
    %v342 = vrot.slane %v330, 4
    %v343 = vrot.slane %v331, 4
    %v344 = vrot.slane %v332, 4
    %v345 = vrot.slane %v333, 4
    %v346 = vrot.slane %v334, 4
    %v347 = vrot.slane %v335, 4
    %v354 = vadd.f32 %v322, %v342
    %v355 = vadd.f32 %v323, %v343
    %v356 = vadd.f32 %v324, %v344
    %v357 = vadd.f32 %v325, %v345
    %v358 = vadd.f32 %v326, %v346
    %v359 = vadd.f32 %v327, %v347
    %s360 = sld [smem:[#allocation2 + $0x4]]
    %v361 = vstv %s360
    %v362 = vmul.f32 %v361, %v50
    %v363 = vmul.f32 %v361, %v51
    %v364 = vmul.f32 %v361, %v52
    %v365 = vmul.f32 %v361, %v53
    %v366 = vmul.f32 %v361, %v54
    %v367 = vmul.f32 %v361, %v55
    %v374 = vrot.slane %v362, 5
    %v375 = vrot.slane %v363, 5
    %v376 = vrot.slane %v364, 5
    %v377 = vrot.slane %v365, 5
    %v378 = vrot.slane %v366, 5
    %v379 = vrot.slane %v367, 5
    %v386 = vadd.f32 %v354, %v374
    %v387 = vadd.f32 %v355, %v375
    %v388 = vadd.f32 %v356, %v376
    %v389 = vadd.f32 %v357, %v377
    %v390 = vadd.f32 %v358, %v378
    %v391 = vadd.f32 %v359, %v379
    %s392 = sld [smem:[#allocation2 + $0xa]]
    %v393 = vstv %s392
    %v394 = vmul.f32 %v393, %v56
    %v395 = vmul.f32 %v393, %v57
    %v396 = vmul.f32 %v393, %v58
    %v397 = vmul.f32 %v393, %v59
    %v398 = vmul.f32 %v393, %v60
    %v399 = vmul.f32 %v393, %v61
    %v406 = vrot.slane %v394, 5
    %v407 = vrot.slane %v395, 5
    %v408 = vrot.slane %v396, 5
    %v409 = vrot.slane %v397, 5
    %v410 = vrot.slane %v398, 5
    %v411 = vrot.slane %v399, 5
    %v418 = vadd.f32 %v386, %v406
    %v419 = vadd.f32 %v387, %v407
    %v420 = vadd.f32 %v388, %v408
    %v421 = vadd.f32 %v389, %v409
    %v422 = vadd.f32 %v390, %v410
    %v423 = vadd.f32 %v391, %v411
    %v424 = vxor.u32 %v418, 2147483648
    %v425 = vxor.u32 %v419, 2147483648
    %v426 = vxor.u32 %v420, 2147483648
    %v427 = vxor.u32 %v421, 2147483648
    %v428 = vxor.u32 %v422, 2147483648
    %v429 = vxor.u32 %v423, 2147483648
    %v430 = vmul.f32 %v424, 1.442695
    %v431 = vpow.pop %v430
    %v432 = vmul.f32 %v425, 1.442695
    %v433 = vpow.pop %v432
    %v434 = vmul.f32 %v426, 1.442695
    %v435 = vpow.pop %v434
    %v436 = vmul.f32 %v427, 1.442695
    %v437 = vpow.pop %v436
    %v438 = vmul.f32 %v428, 1.442695
    %v439 = vpow.pop %v438
    %v440 = vmul.f32 %v429, 1.442695
    %v441 = vpow.pop %v440
    %v442 = vadd.f32 %v431, 1.0
    %v443 = vadd.f32 %v433, 1.0
    %v444 = vadd.f32 %v435, 1.0
    %v445 = vadd.f32 %v437, 1.0
    %v446 = vadd.f32 %v439, 1.0
    %v447 = vadd.f32 %v441, 1.0
    %v448 = vrcp.pop %v442
    %v449 = vmul.f32 1.0, %v448
    %v450 = vrcp.pop %v443
    %v451 = vmul.f32 1.0, %v450
    %v452 = vrcp.pop %v444
    %v453 = vmul.f32 1.0, %v452
    %v454 = vrcp.pop %v445
    %v455 = vmul.f32 1.0, %v454
    %v456 = vrcp.pop %v446
    %v457 = vmul.f32 1.0, %v456
    %v458 = vrcp.pop %v447
    %v459 = vmul.f32 1.0, %v458
    %vm460 = vcmp.eq.f32.partialorder %v50, 0.0
    %vm461 = vcmp.eq.f32.partialorder %v51, 0.0
    %vm462 = vcmp.eq.f32.partialorder %v52, 0.0
    %vm463 = vcmp.eq.f32.partialorder %v53, 0.0
    %vm464 = vcmp.eq.f32.partialorder %v54, 0.0
    %vm465 = vcmp.eq.f32.partialorder %v55, 0.0
    %v472 = vrot.slane %v449, 7
    %v473 = vrot.slane %v451, 7
    %v474 = vrot.slane %v453, 7
    %v475 = vrot.slane %v455, 7
    %v476 = vrot.slane %v457, 7
    %v477 = vrot.slane %v459, 7
    %v484 = vsel %vm460, 0.0, %v472
    %v485 = vsel %vm461, 0.0, %v473
    %v486 = vsel %vm462, 0.0, %v474
    %v487 = vsel %vm463, 0.0, %v475
    %v488 = vsel %vm464, 0.0, %v476
    %v489 = vsel %vm465, 0.0, %v477
    %vm490 = vcmp.eq.f32.partialorder %v56, 0.0
    %vm491 = vcmp.eq.f32.partialorder %v57, 0.0
    %vm492 = vcmp.eq.f32.partialorder %v58, 0.0
    %vm493 = vcmp.eq.f32.partialorder %v59, 0.0
    %vm494 = vcmp.eq.f32.partialorder %v60, 0.0
    %vm495 = vcmp.eq.f32.partialorder %v61, 0.0
    %v496 = vsel %vm490, 1.0, %v484
    %v497 = vsel %vm491, 1.0, %v485
    %v498 = vsel %vm492, 1.0, %v486
    %v499 = vsel %vm493, 1.0, %v487
    %v500 = vsel %vm494, 1.0, %v488
    %v501 = vsel %vm495, 1.0, %v489
    %v502 = vcombine.low %v449, %v451
    %v503 = vcombine.low %v453, %v455
    %v504 = vcombine.low %v457, %v459
    %v506 = vunpack.c.l.s4 1966171168
    %v507 = vunpack.c.0.s8 %v506
    %v508 = vlaneseq
    %v509 = vshrl.u32 %v508, 7
    %v510 = vsub.s32 %v507, %v509
    %v511 = vrot.slane %v502, %v510
    %v513 = vunpack.c.l.s4 1966171168
    %v514 = vunpack.c.0.s8 %v513
    %v515 = vlaneseq
    %v516 = vshrl.u32 %v515, 7
    %v517 = vsub.s32 %v514, %v516
    %v518 = vrot.slane %v503, %v517
    %v520 = vunpack.c.l.s4 1966171168
    %v521 = vunpack.c.0.s8 %v520
    %v522 = vlaneseq
    %v523 = vshrl.u32 %v522, 7
    %v524 = vsub.s32 %v521, %v523
    %v525 = vrot.slane %v504, %v524
    %v526 = vcombine.low %v511, %v518
    %v528 = vunpack.c.l.s4 1966171168
    %v529 = vunpack.c.0.s8 %v528
    %v530 = vlaneseq
    %v531 = vshrl.u32 %v530, 7
    %v532 = vsub.s32 %v529, %v531
    %v533 = vrot.slane %v526, %v532
    %v535 = vunpack.c.l.s4 1966171168
    %v536 = vunpack.c.0.s8 %v535
    %v537 = vlaneseq
    %v538 = vshrl.u32 %v537, 7
    %v539 = vsub.s32 %v536, %v538
    %v540 = vrot.slane %v525, %v539
    %v541 = vcombine.low %v533, %v540
    %v543 = vlaneseq
    %vm544 = vcmp.ge.s32.totalorder %v543, 0
    %vm545 = vcmp.lt.s32.totalorder %v543, 768
    %vm546 = vmand %vm544, %vm545
    %547 = vst.msk [vmem:[#allocation9] ss:$2 sm:$0x3f] %vm546, %v541
    %v548 = vsub.f32 %v50, %v56
    %v549 = vsub.f32 %v51, %v57
    %v550 = vsub.f32 %v52, %v58
    %v551 = vsub.f32 %v53, %v59
    %v552 = vsub.f32 %v54, %v60
    %v553 = vsub.f32 %v55, %v61
    %v560 = vrot.slane %v548, 7
    %v561 = vrot.slane %v549, 7
    %v562 = vrot.slane %v550, 7
    %v563 = vrot.slane %v551, 7
    %v564 = vrot.slane %v552, 7
    %v565 = vrot.slane %v553, 7
    %v572 = vmul.f32 %v496, %v560
    %v573 = vmul.f32 %v497, %v561
    %v574 = vmul.f32 %v498, %v562
    %v575 = vmul.f32 %v499, %v563
    %v576 = vmul.f32 %v500, %v564
    %v577 = vmul.f32 %v501, %v565
    %v584 = vrot.slane %v572, 1
    %v585 = vrot.slane %v573, 1
    %v586 = vrot.slane %v574, 1
    %v587 = vrot.slane %v575, 1
    %v588 = vrot.slane %v576, 1
    %v589 = vrot.slane %v577, 1
    %v596 = vadd.f32 %v56, %v584
    %v597 = vadd.f32 %v57, %v585
    %v598 = vadd.f32 %v58, %v586
    %v599 = vadd.f32 %v59, %v587
    %v600 = vadd.f32 %v60, %v588
    %v601 = vadd.f32 %v61, %v589
    %v608 = vcombine.low %v596, %v597
    %v609 = vcombine.low %v598, %v599
    %v610 = vcombine.low %v600, %v601
    %v612 = vunpack.c.l.s4 1966171168
    %v613 = vunpack.c.0.s8 %v612
    %v614 = vlaneseq
    %v615 = vshrl.u32 %v614, 7
    %v616 = vsub.s32 %v613, %v615
    %v617 = vrot.slane %v608, %v616
    %v619 = vunpack.c.l.s4 1966171168
    %v620 = vunpack.c.0.s8 %v619
    %v621 = vlaneseq
    %v622 = vshrl.u32 %v621, 7
    %v623 = vsub.s32 %v620, %v622
    %v624 = vrot.slane %v609, %v623
    %v626 = vunpack.c.l.s4 1966171168
    %v627 = vunpack.c.0.s8 %v626
    %v628 = vlaneseq
    %v629 = vshrl.u32 %v628, 7
    %v630 = vsub.s32 %v627, %v629
    %v631 = vrot.slane %v610, %v630
    %v632 = vcombine.low %v617, %v624
    %v634 = vunpack.c.l.s4 1966171168
    %v635 = vunpack.c.0.s8 %v634
    %v636 = vlaneseq
    %v637 = vshrl.u32 %v636, 7
    %v638 = vsub.s32 %v635, %v637
    %v639 = vrot.slane %v632, %v638
    %v641 = vunpack.c.l.s4 1966171168
    %v642 = vunpack.c.0.s8 %v641
    %v643 = vlaneseq
    %v644 = vshrl.u32 %v643, 7
    %v645 = vsub.s32 %v642, %v644
    %v646 = vrot.slane %v631, %v645
    %v647 = vcombine.low %v639, %v646
    %s649 = scalar_lea.vmem [#allocation9], 1
    %650 = vst.msk [vmem:[%s649] ss:$2 sm:$0x3f] %vm546, %v647
    // Predicated region
    $region26: #{tpu_custom_call.1} parent=1 // pred_check
      _
    $region27: #{tpu_custom_call.1} parent=1 // pred_check_branch
      %652 = sbr.rel (0) target = $region29
    $region28: #{tpu_custom_call.1} parent=1 // pred_region
      %s654 = ssub.s32 192, 192
      %655 = vsyncadd [#allocation4], %s654
      %s657 = sshll.u32 [#allocation9], 4
      %s658 = int_to_ptr.vmem [resolvable:$true] %s657
      %660 = dma.vmem_to_hbm [thread:$0]  %s658, 192, %s3, [#allocation4]
    $region29: #{tpu_custom_call.1} parent=1 // pred_fallthru
      _
    // Predicated region
    $region30: #{tpu_custom_call.1} parent=1 // pred_check
      _
    $region31: #{tpu_custom_call.1} parent=1 // pred_check_branch
      %662 = sbr.rel (0) target = $region33
    $region32: #{tpu_custom_call.1} parent=1 // pred_region
      %663 = dma.done [#allocation4], 192
    $region33: #{tpu_custom_call.1} parent=1 // pred_fallthru
      _
    %664 = vsyncpa [#allocation3], 1
    %665 = vsyncpa [#allocation8], 1
    %666 = vsyncpa [#allocation4], 1
    %667 = vsyncpa [#allocation5], 1

</llo_original>
